<compile_context>
chip_gen: v6e
topology: v6e:2x2x1
jax: 0.10.0
libtpu: 0.0.40
codegen_flags: <defaults>
</compile_context>

<pallas_src>
import jax
import jax.numpy as jnp
from jax.experimental import pallas as pl
from jax.experimental.pallas import tpu as pltpu


def _linear_kernel(x_ref, w_ref, b_ref, o_ref):
    # (TM, Kp) @ (Kp, Ep) on the MXU, f32 accumulate, + bias row broadcast, cast back.
    acc = jnp.dot(x_ref[...], w_ref[...], preferred_element_type=jnp.float32)
    o_ref[...] = (acc + b_ref[...]).astype(o_ref.dtype)


def _round_up(a, m):
    return ((a + m - 1) // m) * m


def _pick_tiling(rows, max_tile):
    """Split `rows` into equal tiles (multiple of 8) no bigger than max_tile.

    Returns (tile, padded_rows, num_tiles) with padded_rows = tile * num_tiles >= rows
    and padded_rows - rows < 8 + (num_tiles - 1) * 8 (i.e. minimal sublane padding).
    """
    rows = max(rows, 1)
    ntiles = pl.cdiv(rows, max_tile)
    tile = _round_up(pl.cdiv(rows, ntiles), 8)
    return tile, tile * ntiles, ntiles


def prime_embed_chunk(x, w, b, filters, *, tile_rows=1024):
    """PrimeEmbed forward (encode='chunk', input_conv=False).

    x: (B, N, 2, chunk_len); w: (2*chunk_len, emb_dim); b: (emb_dim,).
    Returns (out of shape (B, N, emb_dim), filters).

    NOTE: for tiny B*N the fixed pallas_call launch cost dominates and a fused XLA dot
    would be preferable; the Pallas path is kept unconditional so the kernel is always
    exercised.
    """
    B, N, C, L = x.shape
    K = C * L
    E = w.shape[1]
    M = B * N
    dtype = x.dtype
    x2 = x.reshape(M, K)                      # torch's .view(B, N, -1), (B,N) folded

    cparams = pltpu.CompilerParams(
        dimension_semantics=("parallel",),    # M axis: shard across TCs on v7x
        vmem_limit_bytes=64 * 1024 * 1024,
    )

    if K <= 128 and 128 % K == 0:
        # ---- lane-dense path: pack P rows per 128-lane vreg row -------------------
        P = 128 // K
        Mp = pl.cdiv(M, P)                    # packed rows
        TMp, Mp_pad, ntiles = _pick_tiling(Mp, tile_rows)
        M_pad = Mp_pad * P

        if M_pad == M:
            xp = x2
        else:
            xp = jnp.zeros((M_pad, K), dtype).at[:M].set(x2)
        xp = xp.reshape(Mp_pad, P * K)        # same contiguous bytes, 128 lanes dense

        # Block-diagonal weight (P*K, P*E): P copies of (K,E) on the diagonal.
        eye = jnp.eye(P, dtype=w.dtype)
        wbd = jnp.einsum("pq,ke->pkqe", eye, w).reshape(P * K, P * E)
        bt = jnp.tile(b, P).reshape(1, P * E)

        out_p = pl.pallas_call(
            _linear_kernel,
            out_shape=jax.ShapeDtypeStruct((Mp_pad, P * E), dtype),
            grid=(ntiles,),
            in_specs=[
                pl.BlockSpec((TMp, P * K), lambda i: (i, 0)),
                pl.BlockSpec((P * K, P * E), lambda i: (0, 0)),
                pl.BlockSpec((1, P * E), lambda i: (0, 0)),
            ],
            out_specs=pl.BlockSpec((TMp, P * E), lambda i: (i, 0)),
            compiler_params=cparams,
        )(xp, wbd, bt)

        out = out_p.reshape(M_pad, E)[:M]
    else:
        # ---- fallback: plain M-tiled GEMM (K too wide / not a divisor of 128) -----
        TM, M_pad, ntiles = _pick_tiling(M, tile_rows)
        xp = x2 if M_pad == M else jnp.zeros((M_pad, K), dtype).at[:M].set(x2)

        out_p = pl.pallas_call(
            _linear_kernel,
            out_shape=jax.ShapeDtypeStruct((M_pad, E), dtype),
            grid=(ntiles,),
            in_specs=[
                pl.BlockSpec((TM, K), lambda i: (i, 0)),
                pl.BlockSpec((K, E), lambda i: (0, 0)),
                pl.BlockSpec((1, E), lambda i: (0, 0)),
            ],
            out_specs=pl.BlockSpec((TM, E), lambda i: (i, 0)),
            compiler_params=cparams,
        )(xp, w, b.reshape(1, E))

        out = out_p[:M]

    return out.reshape(B, N, E), filters


if __name__ == "__main__":
    # Small shapes consistent with the module: batch=2, num_chunks=4,
    # chunk_len=8 (so in_features = 2*chunk_len = 16), emb_dim=32.
    B, N, chunk_len, emb_dim = 2, 4, 8, 32
    fan_in = 2 * chunk_len

    key = jax.random.PRNGKey(0)
    k_x, k_w, k_b, k_x2 = jax.random.split(key, 4)

    x = jax.random.normal(k_x, (B, N, 2, chunk_len), dtype=jnp.float32)

    # Deterministic nn.Linear-style init: U(-1/sqrt(fan_in), 1/sqrt(fan_in)).
    bound = 1.0 / (fan_in ** 0.5)
    w = jax.random.uniform(k_w, (fan_in, emb_dim),
                           minval=-bound, maxval=bound, dtype=jnp.float32)
    b = jax.random.uniform(k_b, (emb_dim,),
                           minval=-bound, maxval=bound, dtype=jnp.float32)

    filters = jnp.ones((B, 1), dtype=jnp.float32)  # passed through untouched

    out, f = prime_embed_chunk(x, w, b, filters)
    jax.block_until_ready(out)

    ref = x.reshape(B * N, fan_in) @ w + b
    assert out.shape == (B, N, emb_dim)
    assert jnp.allclose(out.reshape(B * N, emb_dim), ref, atol=1e-4, rtol=1e-4), "mismatch"
    assert f is filters

    # Second check: M not a multiple of the pack factor / tile -> exercises padding path.
    B2, N2 = 3, 37                       # M = 111 (not a multiple of 8)
    x_big = jax.random.normal(k_x2, (B2, N2, 2, chunk_len), dtype=jnp.float32)
    out_big, _ = prime_embed_chunk(x_big, w, b, filters)
    jax.block_until_ready(out_big)
    ref_big = x_big.reshape(B2 * N2, fan_in) @ w + b
    assert jnp.allclose(out_big.reshape(B2 * N2, emb_dim), ref_big,
                        atol=1e-4, rtol=1e-4), "mismatch (padded path)"

    # Third check: M large enough to span multiple grid tiles (equalized tiling path).
    B3, N3 = 16, 700                     # M = 11200 -> Mp = 1400 packed rows, 2 tiles
    x3 = jax.random.normal(k_x2, (B3, N3, 2, chunk_len), dtype=jnp.float32)
    out3, _ = prime_embed_chunk(x3, w, b, filters)
    jax.block_until_ready(out3)
    ref3 = x3.reshape(B3 * N3, fan_in) @ w + b
    assert jnp.allclose(out3.reshape(B3 * N3, emb_dim), ref3,
                        atol=1e-4, rtol=1e-4), "mismatch (multi-tile path)"

    # TODO(synk): other encode branches ('input_conv' strided Conv1d, 'chunk'+input_conv
    # with Conv1d/BatchNorm/ReLU, integer Embedding lookups) are config-dependent and
    # not exercised by this forward path.

    print("KERNEL_OK")
</pallas_src>

<mosaic_0001>
module attributes {stable_mosaic.version = 11 : i64} {
  func.func @_linear_kernel(%arg0: i32, %arg1: memref<8x128xf32, #tpu.memory_space<vmem>>, %arg2: memref<128x256xf32, #tpu.memory_space<vmem>>, %arg3: memref<1x256xf32, #tpu.memory_space<vmem>>, %arg4: memref<8x256xf32, #tpu.memory_space<vmem>>) attributes {dimension_semantics = [#tpu.dimension_semantics<parallel>], iteration_bounds = array<i64: 1>, scalar_prefetch = 0 : i64, scratch_operands = 0 : i64, tpu.core_type = #tpu.core_type<tc>, window_params = [{transform_indices = @transform_0, window_bounds = array<i64: 8, 128>}, {pipeline_mode = #tpu.pipeline_mode<synchronous>, transform_indices = @transform_1, window_bounds = array<i64: 128, 256>}, {pipeline_mode = #tpu.pipeline_mode<synchronous>, transform_indices = @transform_2, window_bounds = array<i64: 1, 256>}, {transform_indices = @transform_3, window_bounds = array<i64: 8, 256>}]} {
    %c0 = arith.constant 0 : index
    %c0_0 = arith.constant 0 : index
    %0 = vector.load %arg1[%c0, %c0_0] : memref<8x128xf32, #tpu.memory_space<vmem>>, vector<8x128xf32>
    %c0_1 = arith.constant 0 : index
    %c0_2 = arith.constant 0 : index
    %1 = vector.load %arg2[%c0_1, %c0_2] : memref<128x256xf32, #tpu.memory_space<vmem>>, vector<128x256xf32>
    %cst = arith.constant dense<0.000000e+00> : vector<8x256xf32>
    %2 = tpu.matmul %0, %1, %cst {dimension_numbers = #tpu.dot_dimension_numbers<[1], [0], [0], [1], [0, 0, 1, 1], [], []>} : vector<8x128xf32>, vector<128x256xf32>, vector<8x256xf32> -> vector<8x256xf32>
    %c0_3 = arith.constant 0 : index
    %c0_4 = arith.constant 0 : index
    %3 = vector.load %arg3[%c0_3, %c0_4] : memref<1x256xf32, #tpu.memory_space<vmem>>, vector<1x256xf32>
    %4 = vector.broadcast %3 : vector<1x256xf32> to vector<8x256xf32>
    %5 = arith.addf %2, %4 : vector<8x256xf32>
    %c0_5 = arith.constant 0 : index
    %c0_6 = arith.constant 0 : index
    %6 = vector.load %arg4[%c0_5, %c0_6] : memref<8x256xf32, #tpu.memory_space<vmem>>, vector<8x256xf32>
    tpu.vector_store %arg4[%c0_5, %c0_6], %5 {strides = array<i32>} : memref<8x256xf32, #tpu.memory_space<vmem>>, vector<8x256xf32>,
    return
  }
  func.func @transform_0(%arg0: i32) -> (i32, i32) {
    %c0_i32 = arith.constant 0 : i32
    %c0_i32_0 = arith.constant 0 : i32
    return %arg0, %c0_i32 : i32, i32
  }
  func.func @transform_1(%arg0: i32) -> (i32, i32) {
    %c0_i32 = arith.constant 0 : i32
    %c0_i32_0 = arith.constant 0 : i32
    %c0_i32_1 = arith.constant 0 : i32
    return %c0_i32, %c0_i32_0 : i32, i32
  }
  func.func @transform_2(%arg0: i32) -> (i32, i32) {
    %c0_i32 = arith.constant 0 : i32
    %c0_i32_0 = arith.constant 0 : i32
    %c0_i32_1 = arith.constant 0 : i32
    return %c0_i32, %c0_i32_0 : i32, i32
  }
  func.func @transform_3(%arg0: i32) -> (i32, i32) {
    %c0_i32 = arith.constant 0 : i32
    %c0_i32_0 = arith.constant 0 : i32
    return %arg0, %c0_i32 : i32, i32
  }
}

</mosaic_0001>

<llo_original>
// kernel: tpu_custom_call.1
$region0: #{tpu_custom_call.1}
  #allocation0 [shape = 'u32[]', space=smem, size = 0x4, offset = 0x4, fixed_abs, tag = 'smem constant byte address 0x4 - core index']
  #allocation1 [shape = 'u32[144,128]{1,0:T(1,128)}', space=vmem, size = 0x12000, scoped, tag = 'internal scratch']
  %s0 = inlined_call_operand.hbm [shape: f32[8,128], index: 0, kind: input, shape index: {}]
  %s1 = inlined_call_operand.hbm [shape: f32[128,256], index: 1, kind: input, shape index: {}]
  %s2 = inlined_call_operand.vmem [shape: f32[1,256], index: 2, kind: input, shape index: {}]
  %s3 = inlined_call_operand.hbm [shape: f32[8,256], index: 3, kind: output, shape index: {}]
  %s4 = sld [smem:[#allocation0]]
  $region30: #{tpu_custom_call.1} parent=0
    _
  %s6 = ssub.s32 1, %s4
  %s7 = scalar_select 0, %s6, %s4
  $region1: #{tpu_custom_call.1} parent=0
    #allocation2 [shape = 'u8[4096]{0}', space=vmem, size = 0x1000, scoped, tag = 'input window, operand 0, single buffered']
    #allocation3 [shape = 's32[1]{0}', space=sflag, size = 0x4, scoped, tag = 'scoped memory for tpu_custom_call.1']
    #allocation4 [shape = 's32[1]{0}', space=sflag, size = 0x4, scoped, tag = 'scoped memory for tpu_custom_call.1']
    #allocation5 [shape = 'u8[131072]{0}', space=vmem, size = 0x20000, scoped, tag = 'input window, operand 1, single buffered']
    #allocation6 [shape = 's32[1]{0}', space=sflag, size = 0x4, scoped, tag = 'scoped memory for tpu_custom_call.1']
    #allocation7 [shape = 'u8[8192]{0}', space=vmem, size = 0x2000, scoped, tag = 'output window, operand 0, single buffered']
    %8 = vsyncpa [#allocation3], 0
    %9 = vsyncpa [#allocation6], 0
    %10 = vsyncpa [#allocation4], 0
    // Predicated region
    $region2: #{tpu_custom_call.1} parent=1 // pred_check
      _
    $region3: #{tpu_custom_call.1} parent=1 // pred_check_branch
      %12 = sbr.rel (0) target = $region5
    $region4: #{tpu_custom_call.1} parent=1 // pred_region
      %s14 = ssub.s32 128, 128
      %15 = vsyncadd [#allocation3], %s14
      %s17 = sshll.u32 [#allocation2], 4
      %s18 = int_to_ptr.vmem [resolvable:$true] %s17
      %20 = dma.hbm_to_vmem [thread:$0]  %s0, 128, %s18, [#allocation3]
    $region5: #{tpu_custom_call.1} parent=1 // pred_fallthru
      _
    // Predicated region
    $region6: #{tpu_custom_call.1} parent=1 // pred_check
      _
    $region7: #{tpu_custom_call.1} parent=1 // pred_check_branch
      %22 = sbr.rel (0) target = $region9
    $region8: #{tpu_custom_call.1} parent=1 // pred_region
      %s24 = ssub.s32 4096, 4096
      %25 = vsyncadd [#allocation6], %s24
      %s26 = sshll.u32 [#allocation5], 4
      %s27 = int_to_ptr.vmem [resolvable:$true] %s26
      %32 = dma.hbm_to_vmem [thread:$0]  %s1, 4096, %s27, [#allocation6], 256, 256, 16
    $region9: #{tpu_custom_call.1} parent=1 // pred_fallthru
      _
    // Predicated region
    $region10: #{tpu_custom_call.1} parent=1 // pred_check
      _
    $region11: #{tpu_custom_call.1} parent=1 // pred_check_branch
      %34 = sbr.rel (0) target = $region13
    $region12: #{tpu_custom_call.1} parent=1 // pred_region
      _
    $region13: #{tpu_custom_call.1} parent=1 // pred_fallthru
      _
    // Predicated region
    $region14: #{tpu_custom_call.1} parent=1 // pred_check
      _
    $region15: #{tpu_custom_call.1} parent=1 // pred_check_branch
      %36 = sbr.rel (0) target = $region17
    $region16: #{tpu_custom_call.1} parent=1 // pred_region
      %37 = dma.done [#allocation3], 128
    $region17: #{tpu_custom_call.1} parent=1 // pred_fallthru
      _
    // Predicated region
    $region18: #{tpu_custom_call.1} parent=1 // pred_check
      _
    $region19: #{tpu_custom_call.1} parent=1 // pred_check_branch
      %39 = sbr.rel (0) target = $region21
    $region20: #{tpu_custom_call.1} parent=1 // pred_region
      %40 = dma.done [#allocation6], 4096
    $region21: #{tpu_custom_call.1} parent=1 // pred_fallthru
      _
    %v41 = vld [vmem:[#allocation2] sm:$0xff]
    %v42 = vld [vmem:[#allocation5] sm:$0xff]
    %v43 = vld [vmem:[#allocation5 + $0x8] sm:$0xff]
    %v44 = vld [vmem:[#allocation5 + $0x10] sm:$0xff]
    %v45 = vld [vmem:[#allocation5 + $0x18] sm:$0xff]
    %v46 = vld [vmem:[#allocation5 + $0x20] sm:$0xff]
    %v47 = vld [vmem:[#allocation5 + $0x28] sm:$0xff]
    %v48 = vld [vmem:[#allocation5 + $0x30] sm:$0xff]
    %v49 = vld [vmem:[#allocation5 + $0x38] sm:$0xff]
    %v50 = vld [vmem:[#allocation5 + $0x40] sm:$0xff]
    %v51 = vld [vmem:[#allocation5 + $0x48] sm:$0xff]
    %v52 = vld [vmem:[#allocation5 + $0x50] sm:$0xff]
    %v53 = vld [vmem:[#allocation5 + $0x58] sm:$0xff]
    %v54 = vld [vmem:[#allocation5 + $0x60] sm:$0xff]
    %v55 = vld [vmem:[#allocation5 + $0x68] sm:$0xff]
    %v56 = vld [vmem:[#allocation5 + $0x70] sm:$0xff]
    %v57 = vld [vmem:[#allocation5 + $0x78] sm:$0xff]
    %v58 = vld [vmem:[#allocation5 + $0x80] sm:$0xff]
    %v59 = vld [vmem:[#allocation5 + $0x88] sm:$0xff]
    %v60 = vld [vmem:[#allocation5 + $0x90] sm:$0xff]
    %v61 = vld [vmem:[#allocation5 + $0x98] sm:$0xff]
    %v62 = vld [vmem:[#allocation5 + $0xa0] sm:$0xff]
    %v63 = vld [vmem:[#allocation5 + $0xa8] sm:$0xff]
    %v64 = vld [vmem:[#allocation5 + $0xb0] sm:$0xff]
    %v65 = vld [vmem:[#allocation5 + $0xb8] sm:$0xff]
    %v66 = vld [vmem:[#allocation5 + $0xc0] sm:$0xff]
    %v67 = vld [vmem:[#allocation5 + $0xc8] sm:$0xff]
    %v68 = vld [vmem:[#allocation5 + $0xd0] sm:$0xff]
    %v69 = vld [vmem:[#allocation5 + $0xd8] sm:$0xff]
    %v70 = vld [vmem:[#allocation5 + $0xe0] sm:$0xff]
    %v71 = vld [vmem:[#allocation5 + $0xe8] sm:$0xff]
    %v72 = vld [vmem:[#allocation5 + $0xf0] sm:$0xff]
    %v73 = vld [vmem:[#allocation5 + $0xf8] sm:$0xff]
    %v74 = vld [vmem:[%s2] sm:$0x3]
    %v76 = vlaneseq
    %v77 = vshrl.u32 %v76, 7
    %v78 = vsub.s32 0, %v77
    %v79 = vrot.slane %v74, %v78
    %v80 = vlaneseq
    %v81 = vshrl.u32 %v80, 7
    %v82 = vsub.s32 1, %v81
    %v83 = vrot.slane %v74, %v82
    %86 = vmatprep.subr.mxu0 %v73
    %87 = vmatpush1.msra.mxu0 %v72
    %88 = vmatprep.subr.mxu0 %v71
    %89 = vmatpush1.msra.mxu0 %v70
    %90 = vmatprep.subr.mxu0 %v69
    %91 = vmatpush1.msra.mxu0 %v68
    %92 = vmatprep.subr.mxu0 %v67
    %93 = vmatpush1.msra.mxu0 %v66
    %94 = vmatprep.subr.mxu0 %v65
    %95 = vmatpush1.msra.mxu0 %v64
    %96 = vmatprep.subr.mxu0 %v63
    %97 = vmatpush1.msra.mxu0 %v62
    %98 = vmatprep.subr.mxu0 %v61
    %99 = vmatpush1.msra.mxu0 %v60
    %100 = vmatprep.subr.mxu0 %v59
    %101 = vmatpush1.msra.mxu0 %v58
    %102 = vmatprep.subr.mxu0 %v57
    %103 = vmatpush1.msra.mxu0 %v56
    %104 = vmatprep.subr.mxu0 %v55
    %105 = vmatpush1.msra.mxu0 %v54
    %106 = vmatprep.subr.mxu0 %v53
    %107 = vmatpush1.msra.mxu0 %v52
    %108 = vmatprep.subr.mxu0 %v51
    %109 = vmatpush1.msra.mxu0 %v50
    %110 = vmatprep.subr.mxu0 %v49
    %111 = vmatpush1.msra.mxu0 %v48
    %112 = vmatprep.subr.mxu0 %v47
    %113 = vmatpush1.msra.mxu0 %v46
    %114 = vmatprep.subr.mxu0 %v45
    %115 = vmatpush1.msra.mxu0 %v44
    %116 = vmatprep.subr.mxu0 %v43
    %117 = vmatpush1.msra.mxu0 %v42
    %118 = vmatprep.subr.mxu0 0.0
    %119 = vmatpush2.msra.mxu0 0.0
    %120 = vmatprep.subr.mxu0 0.0
    %121 = vmatpush2.msra.mxu0 0.0
    %122 = vmatprep.subr.mxu0 0.0
    %123 = vmatpush2.msra.mxu0 0.0
    %124 = vmatprep.subr.mxu0 0.0
    %125 = vmatpush2.msra.mxu0 0.0
    %126 = vmatprep.subr.mxu0 0.0
    %127 = vmatpush2.msra.mxu0 0.0
    %128 = vmatprep.subr.mxu0 0.0
    %129 = vmatpush2.msra.mxu0 0.0
    %130 = vmatprep.subr.mxu0 0.0
    %131 = vmatpush2.msra.mxu0 0.0
    %132 = vmatprep.subr.mxu0 0.0
    %133 = vmatpush2.msra.mxu0 0.0
    %134 = vmatprep.subr.mxu0 0.0
    %135 = vmatpush2.msra.mxu0 0.0
    %136 = vmatprep.subr.mxu0 0.0
    %137 = vmatpush2.msra.mxu0 0.0
    %138 = vmatprep.subr.mxu0 0.0
    %139 = vmatpush2.msra.mxu0 0.0
    %140 = vmatprep.subr.mxu0 0.0
    %141 = vmatpush2.msra.mxu0 0.0
    %142 = vmatprep.subr.mxu0 0.0
    %143 = vmatpush2.msra.mxu0 0.0
    %144 = vmatprep.subr.mxu0 0.0
    %145 = vmatpush2.msra.mxu0 0.0
    %146 = vmatprep.subr.mxu0 0.0
    %147 = vmatpush2.msra.mxu0 0.0
    %148 = vmatprep.subr.mxu0 0.0
    %149 = vmatpush2.msra.mxu0 0.0
    %150 = vmatprep.mubr.f32.mxu0 0.0
    %151 = vmatmul.mubr.f32.gmra.mxu0 %v41
    %v152 = vpop.f32.mrf.mxu0
    %v153 = vadd.f32 %v79, %v152
    %v154 = vpop.f32.mrf.mxu0
    %v155 = vadd.f32 %v83, %v154
    %156 = vdwg.mxu0
    %157 = vst [vmem:[#allocation7] sm:$0xff] %v153
    %158 = vst [vmem:[#allocation7 + $0x8] sm:$0xff] %v155
    // Predicated region
    $region22: #{tpu_custom_call.1} parent=1 // pred_check
      _
    $region23: #{tpu_custom_call.1} parent=1 // pred_check_branch
      %160 = sbr.rel (0) target = $region25
    $region24: #{tpu_custom_call.1} parent=1 // pred_region
      %s162 = ssub.s32 256, 256
      %163 = vsyncadd [#allocation4], %s162
      %s165 = sshll.u32 [#allocation7], 4
      %s166 = int_to_ptr.vmem [resolvable:$true] %s165
      %168 = dma.vmem_to_hbm [thread:$0]  %s166, 256, %s3, [#allocation4]
    $region25: #{tpu_custom_call.1} parent=1 // pred_fallthru
      _
    // Predicated region
    $region26: #{tpu_custom_call.1} parent=1 // pred_check
      _
    $region27: #{tpu_custom_call.1} parent=1 // pred_check_branch
      %170 = sbr.rel (0) target = $region29
    $region28: #{tpu_custom_call.1} parent=1 // pred_region
      %171 = dma.done [#allocation4], 256
    $region29: #{tpu_custom_call.1} parent=1 // pred_fallthru
      _
    %172 = vsyncpa [#allocation3], 1
    %173 = vsyncpa [#allocation6], 1
    %174 = vsyncpa [#allocation4], 1

</llo_original>
